<compile_context>
chip_gen: v7x
topology: tpu7x:2x2x1
jax: 0.10.0
libtpu: 0.0.40
codegen_flags: <defaults>
</compile_context>

<pallas_src>
import jax
import jax.numpy as jnp
from jax.experimental import pallas as pl
from jax.experimental.pallas import tpu as pltpu


def _round_up(v, m):
    return (v + m - 1) // m * m


def _boundary_attention_kernel(w_ref, b_ref, x_ref, bd_ref, o_ref):
    # w_ref : (C, C)   BN-folded 1x1-conv weight (resident: constant index_map)
    # b_ref : (C, 1)   BN-folded bias (f32)
    # x_ref, bd_ref, o_ref : (C, TC) lane-dense tiles (batch dim squeezed)
    att = jnp.dot(w_ref[...], bd_ref[...],
                  preferred_element_type=jnp.float32)      # MXU (hidden by DMA)
    att = att + b_ref[...]                                 # lane-broadcast bias
    att = jax.nn.sigmoid(att)                              # EUP
    x = x_ref[...].astype(jnp.float32)
    # Literal forward of the module: x * att + x * (1 - att).
    out = x * att + x * (1.0 - att)
    o_ref[...] = out.astype(o_ref.dtype)


def boundary_attention(x, boundary, conv_w, conv_b, gamma, beta,
                       running_mean, running_var, eps=1e-5,
                       target_block_bytes=2 * 1024 * 1024):
    """Pallas TPU implementation of BoundaryAttention.forward (eval mode).

    x, boundary : (N, C, H, W) float arrays.
    conv_w      : (C, C)  weight of Conv2d(C, C, kernel_size=1) (1x1 dims squeezed).
    conv_b      : (C,)    conv bias.
    gamma, beta, running_mean, running_var : (C,) BatchNorm2d parameters.
    """
    assert x.shape == boundary.shape
    n, c, h, w = x.shape
    hw = h * w
    itemsize = jnp.dtype(x.dtype).itemsize

    # Fold eval-mode BatchNorm into the 1x1 conv (inference fusion).
    # TODO(synk): training-mode BatchNorm (batch statistics + running-stat
    # updates) is not implemented in this kernel.
    inv_std = jax.lax.rsqrt(running_var.astype(jnp.float32) + eps)
    scale = gamma.astype(jnp.float32) * inv_std                       # (C,)
    w_fold = conv_w.astype(jnp.float32) * scale[:, None]              # (C, C)
    b_fold = ((conv_b.astype(jnp.float32) - running_mean.astype(jnp.float32))
              * scale + beta.astype(jnp.float32))                     # (C,)

    # Match matmul operand dtypes: native bf16 MXU path for bf16 inputs,
    # f32 x f32 otherwise.  Bias stays f32 (added post-matmul).
    mm_dtype = x.dtype if x.dtype == jnp.bfloat16 else jnp.float32
    w2 = w_fold.astype(mm_dtype)                                      # (C, C)
    b2 = b_fold[:, None]                                              # (C, 1)

    # --- spatial layout ----------------------------------------------------
    # Fast path (H*W multiple of 128): plain reshape, no HBM copies.
    if hw % 128 == 0:
        hw_pad = hw
        x3 = x.reshape(n, c, hw)
        bd3 = boundary.reshape(n, c, hw)
    else:
        # Slow path: one extra pass to pad the lane dim to a 128 multiple.
        hw_pad = _round_up(hw, 128)
        pad = ((0, 0), (0, 0), (0, hw_pad - hw))
        x3 = jnp.pad(x.reshape(n, c, hw), pad)
        bd3 = jnp.pad(boundary.reshape(n, c, hw), pad)

    # Tile width from a per-block byte budget so each grid step streams
    # ~target_block_bytes per array (amortizes the fixed per-step overhead);
    # multiple of 128 lanes, capped at the (padded) spatial extent.
    tc_budget = max(128, (target_block_bytes // max(c * itemsize, 1)) // 128 * 128)
    tc = min(hw_pad, tc_budget)
    if n == 1 and tc >= hw_pad and hw_pad >= 256:
        # Keep >= 2 grid programs so both v7x TensorCores get work.
        tc = _round_up(pl.cdiv(hw_pad, 2), 128)
    grid = (n, pl.cdiv(hw_pad, tc))

    cost = pl.CostEstimate(
        flops=2 * n * hw * c * c + 4 * n * c * hw,
        transcendentals=n * c * hw,
        bytes_accessed=3 * n * c * hw * itemsize,
    )

    out = pl.pallas_call(
        _boundary_attention_kernel,
        out_shape=jax.ShapeDtypeStruct((n, c, hw_pad), x.dtype),
        grid_spec=pltpu.PrefetchScalarGridSpec(
            num_scalar_prefetch=0,
            grid=grid,
            in_specs=[
                pl.BlockSpec((c, c), lambda b, j: (0, 0)),       # resident weight
                pl.BlockSpec((c, 1), lambda b, j: (0, 0)),       # resident bias
                pl.BlockSpec((None, c, tc), lambda b, j: (b, 0, j)),
                pl.BlockSpec((None, c, tc), lambda b, j: (b, 0, j)),
            ],
            out_specs=pl.BlockSpec((None, c, tc), lambda b, j: (b, 0, j)),
        ),
        compiler_params=pltpu.CompilerParams(
            dimension_semantics=("parallel", "parallel"),
            vmem_limit_bytes=32 * 1024 * 1024,
        ),
        cost_estimate=cost,
    )(w2, b2, x3, bd3)

    if hw_pad != hw:
        out = out[:, :, :hw]
    return out.reshape(n, c, h, w)


def boundary_attention_ref(x, boundary, conv_w, conv_b, gamma, beta,
                           running_mean, running_var, eps=1e-5):
    """Pure-JAX reference matching PyTorch eval-mode forward (unfolded)."""
    n, c, h, w = x.shape
    bd = boundary.reshape(n, c, h * w).astype(jnp.float32)
    att = jnp.einsum('oi,nik->nok', conv_w.astype(jnp.float32), bd)
    att = att + conv_b[None, :, None]
    att = (att - running_mean[None, :, None]) * jax.lax.rsqrt(
        running_var[None, :, None] + eps)
    att = att * gamma[None, :, None] + beta[None, :, None]
    att = jax.nn.sigmoid(att).reshape(n, c, h, w).astype(jnp.float32)
    x32 = x.astype(jnp.float32)
    return (x32 * att + x32 * (1.0 - att)).astype(x.dtype)


if __name__ == "__main__":
    key = jax.random.PRNGKey(0)
    ks = jax.random.split(key, 8)

    N, C, H, W = 2, 4, 16, 16
    x = jax.random.normal(ks[0], (N, C, H, W), dtype=jnp.float32)
    boundary = jax.random.normal(ks[1], (N, C, H, W), dtype=jnp.float32)

    # Conv2d(C, C, kernel_size=1) parameters, squeezed from (C, C, 1, 1).
    conv_w = 0.3 * jax.random.normal(ks[2], (C, C), dtype=jnp.float32)
    conv_b = 0.1 * jax.random.normal(ks[3], (C,), dtype=jnp.float32)

    # BatchNorm2d(C) parameters (eval mode / running statistics).
    gamma = 1.0 + 0.1 * jax.random.normal(ks[4], (C,), dtype=jnp.float32)
    beta = 0.1 * jax.random.normal(ks[5], (C,), dtype=jnp.float32)
    running_mean = 0.1 * jax.random.normal(ks[6], (C,), dtype=jnp.float32)
    running_var = jax.nn.softplus(
        jax.random.normal(ks[7], (C,), dtype=jnp.float32)) + 0.5

    out = boundary_attention(x, boundary, conv_w, conv_b, gamma, beta,
                             running_mean, running_var)
    out = jax.block_until_ready(out)

    ref = boundary_attention_ref(x, boundary, conv_w, conv_b, gamma, beta,
                                 running_mean, running_var)
    assert out.shape == (N, C, H, W)
    assert jnp.allclose(out, ref, atol=1e-5, rtol=1e-5), float(
        jnp.max(jnp.abs(out - ref)))

    print("KERNEL_OK")
</pallas_src>

<mosaic_0001>
module attributes {stable_mosaic.version = 11 : i64} {
  func.func @_boundary_attention_kernel(%arg0: i32, %arg1: i32, %arg2: memref<4x4xf32, #tpu.memory_space<vmem>>, %arg3: memref<4x1xf32, #tpu.memory_space<vmem>>, %arg4: memref<1x4x256xf32, #tpu.memory_space<vmem>>, %arg5: memref<1x4x256xf32, #tpu.memory_space<vmem>>, %arg6: memref<1x4x256xf32, #tpu.memory_space<vmem>>) attributes {dimension_semantics = [#tpu.dimension_semantics<parallel>, #tpu.dimension_semantics<parallel>], iteration_bounds = array<i64: 2, 1>, scalar_prefetch = 0 : i64, scratch_operands = 0 : i64, tpu.core_type = #tpu.core_type<tc>, window_params = [{pipeline_mode = #tpu.pipeline_mode<synchronous>, transform_indices = @transform_0, window_bounds = array<i64: 4, 4>}, {pipeline_mode = #tpu.pipeline_mode<synchronous>, transform_indices = @transform_1, window_bounds = array<i64: 4, 1>}, {transform_indices = @transform_2, window_bounds = array<i64: 1, 4, 256>}, {transform_indices = @transform_3, window_bounds = array<i64: 1, 4, 256>}, {transform_indices = @transform_4, window_bounds = array<i64: 1, 4, 256>}]} {
    %c0 = arith.constant 0 : index
    %c0_0 = arith.constant 0 : index
    %0 = vector.load %arg2[%c0, %c0_0] : memref<4x4xf32, #tpu.memory_space<vmem>>, vector<4x4xf32>
    %c0_1 = arith.constant 0 : index
    %c0_2 = arith.constant 0 : index
    %c0_3 = arith.constant 0 : index
    %1 = vector.load %arg5[%c0_1, %c0_2, %c0_3] : memref<1x4x256xf32, #tpu.memory_space<vmem>>, vector<1x4x256xf32>
    %2 = vector.shape_cast %1 : vector<1x4x256xf32> to vector<4x256xf32>
    %cst = arith.constant dense<0.000000e+00> : vector<4x256xf32>
    %3 = tpu.matmul %0, %2, %cst {dimension_numbers = #tpu.dot_dimension_numbers<[1], [0], [0], [1], [0, 0, 1, 1], [], []>} : vector<4x4xf32>, vector<4x256xf32>, vector<4x256xf32> -> vector<4x256xf32>
    %c0_4 = arith.constant 0 : index
    %c0_5 = arith.constant 0 : index
    %4 = vector.load %arg3[%c0_4, %c0_5] : memref<4x1xf32, #tpu.memory_space<vmem>>, vector<4x1xf32>
    %5 = vector.broadcast %4 : vector<4x1xf32> to vector<4x256xf32>
    %6 = arith.addf %3, %5 : vector<4x256xf32>
    %7 = arith.negf %6 : vector<4x256xf32>
    %8 = math.exp %7 : vector<4x256xf32>
    %cst_6 = arith.constant 1.000000e+00 : f32
    %9 = vector.broadcast %cst_6 : f32 to vector<4x256xf32>
    %10 = arith.addf %9, %8 : vector<4x256xf32>
    %11 = arith.divf %9, %10 : vector<4x256xf32>
    %c0_7 = arith.constant 0 : index
    %c0_8 = arith.constant 0 : index
    %c0_9 = arith.constant 0 : index
    %12 = vector.load %arg4[%c0_7, %c0_8, %c0_9] : memref<1x4x256xf32, #tpu.memory_space<vmem>>, vector<1x4x256xf32>
    %13 = vector.shape_cast %12 : vector<1x4x256xf32> to vector<4x256xf32>
    %14 = arith.mulf %13, %11 : vector<4x256xf32>
    %cst_10 = arith.constant 1.000000e+00 : f32
    %15 = vector.broadcast %cst_10 : f32 to vector<4x256xf32>
    %16 = arith.subf %15, %11 : vector<4x256xf32>
    %17 = arith.mulf %13, %16 : vector<4x256xf32>
    %18 = arith.addf %14, %17 : vector<4x256xf32>
    %c0_11 = arith.constant 0 : index
    %c0_12 = arith.constant 0 : index
    %c0_13 = arith.constant 0 : index
    %19 = vector.load %arg6[%c0_11, %c0_12, %c0_13] : memref<1x4x256xf32, #tpu.memory_space<vmem>>, vector<1x4x256xf32>
    %20 = vector.shape_cast %19 : vector<1x4x256xf32> to vector<4x256xf32>
    %21 = vector.shape_cast %18 : vector<4x256xf32> to vector<1x4x256xf32>
    tpu.vector_store %arg6[%c0_11, %c0_12, %c0_13], %21 {strides = array<i32>} : memref<1x4x256xf32, #tpu.memory_space<vmem>>, vector<1x4x256xf32>,
    return
  }
  func.func @transform_0(%arg0: i32, %arg1: i32) -> (i32, i32) {
    %c0_i32 = arith.constant 0 : i32
    %c0_i32_0 = arith.constant 0 : i32
    %c0_i32_1 = arith.constant 0 : i32
    return %c0_i32, %c0_i32_0 : i32, i32
  }
  func.func @transform_1(%arg0: i32, %arg1: i32) -> (i32, i32) {
    %c0_i32 = arith.constant 0 : i32
    %c0_i32_0 = arith.constant 0 : i32
    %c0_i32_1 = arith.constant 0 : i32
    return %c0_i32, %c0_i32_0 : i32, i32
  }
  func.func @transform_2(%arg0: i32, %arg1: i32) -> (i32, i32, i32) {
    %c0_i32 = arith.constant 0 : i32
    %c0_i32_0 = arith.constant 0 : i32
    return %arg0, %c0_i32, %arg1 : i32, i32, i32
  }
  func.func @transform_3(%arg0: i32, %arg1: i32) -> (i32, i32, i32) {
    %c0_i32 = arith.constant 0 : i32
    %c0_i32_0 = arith.constant 0 : i32
    return %arg0, %c0_i32, %arg1 : i32, i32, i32
  }
  func.func @transform_4(%arg0: i32, %arg1: i32) -> (i32, i32, i32) {
    %c0_i32 = arith.constant 0 : i32
    %c0_i32_0 = arith.constant 0 : i32
    return %arg0, %c0_i32, %arg1 : i32, i32, i32
  }
}

</mosaic_0001>

<llo_original>
// kernel: tpu_custom_call.1
$region0: #{tpu_custom_call.1}
  #allocation0 [shape = 'u32[]', space=smem, size = 0x4, offset = 0x4, fixed_abs, tag = 'smem constant byte address 0x4 - core index']
  #allocation1 [shape = 'u32[144,128]{1,0:T(1,128)}', space=vmem, size = 0x12000, scoped, tag = 'internal scratch']
  %s0 = inlined_call_operand.hbm [shape: f32[4,4], index: 0, kind: input, shape index: {}]
  %s1 = inlined_call_operand.vmem [shape: f32[4,1], index: 1, kind: input, shape index: {}]
  %s2 = inlined_call_operand.hbm [shape: f32[2,4,256], index: 2, kind: input, shape index: {}]
  %s3 = inlined_call_operand.vmem [shape: f32[2,4,256], index: 3, kind: input, shape index: {}]
  %s4 = inlined_call_operand.hbm [shape: f32[2,4,256], index: 4, kind: output, shape index: {}]
  %s5 = sld [smem:[#allocation0]]
  $region57: #{tpu_custom_call.1} parent=0
    _
  %s7 = ssub.s32 1, %s5
  %s8 = scalar_select 0, %s7, %s5
  $region1: #{tpu_custom_call.1} parent=0
    #allocation2 [shape = 'u8[2048]{0}', space=vmem, size = 0x800, scoped, tag = 'input window, operand 0, single buffered']
    #allocation3 [shape = 's32[2]{0}', space=sflag, size = 0x8, scoped, tag = 'scoped memory for tpu_custom_call.1']
    #allocation4 [shape = 's32[2]{0}', space=sflag, size = 0x8, scoped, tag = 'scoped memory for tpu_custom_call.1']
    #allocation5 [shape = 'u8[8192]{0}', space=vmem, size = 0x2000, scoped, tag = 'input window, operand 2']
    #allocation6 [shape = 's32[2]{0}', space=sflag, size = 0x8, scoped, tag = 'scoped memory for tpu_custom_call.1']
    #allocation7 [shape = 'u8[8192]{0}', space=vmem, size = 0x2000, scoped, tag = 'output window, operand 0']
    %9 = vsyncpa [#allocation3], 0
    %10 = vsyncpa [#allocation6], 0
    %s11 = scalar_lea.sflag [#allocation6], 1
    %12 = vsyncpa %s11, 0
    %13 = vsyncpa [#allocation4], 0
    %s14 = scalar_lea.sflag [#allocation4], 1
    %15 = vsyncpa %s14, 0
    loop: start=0, step=1, limit=4
    $region2: #{tpu_custom_call.1} parent=1 // loop_pre_header
      _
    $region3: #{tpu_custom_call.1} parent=1 // loop_header
      %s17 = sphi 0, %s21
      %p18 = scmp.ge.s32.totalorder %s17, 4
      %s24 = sphi 0, %s36
      %s25 = sphi 0, %s32
      %s26 = sphi 0, %s24
      %s27 = sphi 0, %s25
      %s28 = sphi 0, %s26
      %s29 = sphi 0, %s27
      %s37 = sphi 0, %s37
      %s39 = sphi 0, %s37
      %s40 = sphi 0, %s39
      %s54 = sphi 0, %s40
      %s58 = sphi 0, %s58
      %s60 = sphi 0, %s58
      %s61 = sphi 0, %s60
      %s75 = sphi 0, %s61
      %s83 = sphi 0, %s85
      %s86 = sphi 0, %s83
      %s87 = sphi 0, %s86
      %s103 = sphi 0, %s87
      %s111 = sphi 0, %s113
      %s114 = sphi 0, %s111
      %s115 = sphi 0, %s114
      %s131 = sphi 0, %s115
      %s139 = sphi 0, %s141
      %s142 = sphi 0, %s139
      %s143 = sphi 0, %s142
      %s159 = sphi 0, %s143
    $region4: #{tpu_custom_call.1} parent=1 // loop_header_branch
      %20 = sbr.rel (%p18) target = $region8
    $region5: #{tpu_custom_call.1} parent=1 // loop_body
      %s22 = ssub.s32 %s17, 1
      %s23 = ssub.s32 %s17, 2
      %s30 = sadd.s32 1, %s25
      %p31 = scmp.ge.s32.totalorder %s30, 1
      %s32 = scalar_select %p31, 0, %s30
      %s33 = sadd.s32 1, %s24
      %s34 = scalar_select %p31, %s33, %s24
      %p35 = scmp.ge.s32.totalorder %s34, 2
      %s36 = scalar_select %p35, 0, %s34
      %s38 = sadd.s32 %s37, 1
      %p41 = scmp.eq.s32.totalorder %s17, 1
      %p42 = scmp.ne.s32.totalorder %s37, %s39
      %p43 = scmp.eq.s32.totalorder %s17, 0
      %p44 = por %p42, %p43
      %p45 = scmp.ne.s32.totalorder %s37, %s39
      %p46 = scmp.eq.s32.totalorder %s22, 1
      %p47 = por %p45, %p46
      %p48 = scmp.ne.s32.totalorder %s39, %s40
      %p49 = scmp.eq.s32.totalorder %s22, 0
      %p50 = por %p48, %p49
      %p51 = scmp.ne.s32.totalorder %s39, %s40
      %p52 = scmp.eq.s32.totalorder %s23, 1
      %p53 = por %p51, %p52
      %p55 = scmp.ne.s32.totalorder %s40, %s54
      %p56 = scmp.eq.s32.totalorder %s23, 0
      %p57 = por %p55, %p56
      %s59 = sadd.s32 %s58, 1
      %p62 = scmp.eq.s32.totalorder %s17, 1
      %p63 = scmp.ne.s32.totalorder %s58, %s60
      %p64 = scmp.eq.s32.totalorder %s17, 0
      %p65 = por %p63, %p64
      %p66 = scmp.ne.s32.totalorder %s58, %s60
      %p67 = scmp.eq.s32.totalorder %s22, 1
      %p68 = por %p66, %p67
      %p69 = scmp.ne.s32.totalorder %s60, %s61
      %p70 = scmp.eq.s32.totalorder %s22, 0
      %p71 = por %p69, %p70
      %p72 = scmp.ne.s32.totalorder %s60, %s61
      %p73 = scmp.eq.s32.totalorder %s23, 1
      %p74 = por %p72, %p73
      %p76 = scmp.ne.s32.totalorder %s61, %s75
      %p77 = scmp.eq.s32.totalorder %s23, 0
      %p78 = por %p76, %p77
      %s79 = ssub.s32 %s24, %s36
      %s80 = ssub.s32 %s25, %s32
      %s81 = sor.u32 %s79, %s80
      %p82 = scmp.eq.s32.totalorder %s81, 0
      %s84 = sadd.s32 %s83, 1
      %s85 = scalar_select %p82, %s83, %s84
      %p88 = pneg %p82
      %p89 = scmp.eq.s32.totalorder %s17, 1
      %p90 = por %p88, %p89
      %p91 = scmp.ne.s32.totalorder %s83, %s86
      %p92 = scmp.eq.s32.totalorder %s17, 0
      %p93 = por %p91, %p92
      %p94 = scmp.ne.s32.totalorder %s83, %s86
      %p95 = scmp.eq.s32.totalorder %s22, 1
      %p96 = por %p94, %p95
      %p97 = scmp.ne.s32.totalorder %s86, %s87
      %p98 = scmp.eq.s32.totalorder %s22, 0
      %p99 = por %p97, %p98
      %p100 = scmp.ne.s32.totalorder %s86, %s87
      %p101 = scmp.eq.s32.totalorder %s23, 1
      %p102 = por %p100, %p101
      %p104 = scmp.ne.s32.totalorder %s87, %s103
      %p105 = scmp.eq.s32.totalorder %s23, 0
      %p106 = por %p104, %p105
      %s107 = ssub.s32 %s24, %s36
      %s108 = ssub.s32 %s25, %s32
      %s109 = sor.u32 %s107, %s108
      %p110 = scmp.eq.s32.totalorder %s109, 0
      %s112 = sadd.s32 %s111, 1
      %s113 = scalar_select %p110, %s111, %s112
      %p116 = pneg %p110
      %p117 = scmp.eq.s32.totalorder %s17, 1
      %p118 = por %p116, %p117
      %p119 = scmp.ne.s32.totalorder %s111, %s114
      %p120 = scmp.eq.s32.totalorder %s17, 0
      %p121 = por %p119, %p120
      %p122 = scmp.ne.s32.totalorder %s111, %s114
      %p123 = scmp.eq.s32.totalorder %s22, 1
      %p124 = por %p122, %p123
      %p125 = scmp.ne.s32.totalorder %s114, %s115
      %p126 = scmp.eq.s32.totalorder %s22, 0
      %p127 = por %p125, %p126
      %p128 = scmp.ne.s32.totalorder %s114, %s115
      %p129 = scmp.eq.s32.totalorder %s23, 1
      %p130 = por %p128, %p129
      %p132 = scmp.ne.s32.totalorder %s115, %s131
      %p133 = scmp.eq.s32.totalorder %s23, 0
      %p134 = por %p132, %p133
      %s135 = ssub.s32 %s24, %s36
      %s136 = ssub.s32 %s25, %s32
      %s137 = sor.u32 %s135, %s136
      %p138 = scmp.eq.s32.totalorder %s137, 0
      %s140 = sadd.s32 %s139, 1
      %s141 = scalar_select %p138, %s139, %s140
      %p144 = pneg %p138
      %p145 = scmp.eq.s32.totalorder %s17, 1
      %p146 = por %p144, %p145
      %p147 = scmp.ne.s32.totalorder %s139, %s142
      %p148 = scmp.eq.s32.totalorder %s17, 0
      %p149 = por %p147, %p148
      %p150 = scmp.ne.s32.totalorder %s139, %s142
      %p151 = scmp.eq.s32.totalorder %s22, 1
      %p152 = por %p150, %p151
      %p153 = scmp.ne.s32.totalorder %s142, %s143
      %p154 = scmp.eq.s32.totalorder %s22, 0
      %p155 = por %p153, %p154
      %p156 = scmp.ne.s32.totalorder %s142, %s143
      %p157 = scmp.eq.s32.totalorder %s23, 1
      %p158 = por %p156, %p157
      %p160 = scmp.ne.s32.totalorder %s143, %s159
      %p161 = scmp.eq.s32.totalorder %s23, 0
      %p162 = por %p160, %p161
      %p163 = scmp.le.s32.totalorder 1, %s17
      %p164 = scmp.lt.s32.totalorder %s17, 3
      %p165 = pnand %p163, %p164
      %p166 = pneg %p165
      // Predicated region
      $region9: #{tpu_custom_call.1} parent=5 // pred_check
        _
      $region10: #{tpu_custom_call.1} parent=5 // pred_check_branch
        %168 = sbr.rel (%p165) target = $region12
      $region11: #{tpu_custom_call.1} parent=5 // pred_region
        %s169 = ssub.s32 %s17, 1
        // Predicated region
        $region13: #{tpu_custom_call.1} parent=11 // pred_check
          %p170 = pneg %p50
        $region14: #{tpu_custom_call.1} parent=11 // pred_check_branch
          %172 = sbr.rel (%p170) target = $region16
        $region15: #{tpu_custom_call.1} parent=11 // pred_region
          %s174 = ssub.s32 64, 64
          %175 = vsyncadd [#allocation3], %s174
          %s177 = sshll.u32 [#allocation2], 4
          %s178 = int_to_ptr.vmem [resolvable:$true] %s177
          %180 = dma.hbm_to_vmem [thread:$0]  %s0, 64, %s178, [#allocation3]
        $region16: #{tpu_custom_call.1} parent=11 // pred_fallthru
          _
        // Predicated region
        $region17: #{tpu_custom_call.1} parent=11 // pred_check
          %p181 = pneg %p71
        $region18: #{tpu_custom_call.1} parent=11 // pred_check_branch
          %183 = sbr.rel (%p181) target = $region20
        $region19: #{tpu_custom_call.1} parent=11 // pred_region
          _
        $region20: #{tpu_custom_call.1} parent=11 // pred_fallthru
          _
      $region12: #{tpu_custom_call.1} parent=5 // pred_fallthru
        _
      %p184 = scmp.lt.s32.totalorder %s17, 2
      // Predicated region
      $region21: #{tpu_custom_call.1} parent=5 // pred_check
        %p185 = pneg %p184
      $region22: #{tpu_custom_call.1} parent=5 // pred_check_branch
        %187 = sbr.rel (%p185) target = $region24
      $region23: #{tpu_custom_call.1} parent=5 // pred_region
        // Predicated region
        $region25: #{tpu_custom_call.1} parent=23 // pred_check
          %p188 = pneg %p93
        $region26: #{tpu_custom_call.1} parent=23 // pred_check_branch
          %190 = sbr.rel (%p188) target = $region28
        $region27: #{tpu_custom_call.1} parent=23 // pred_region
          %s191 = sand.u32 %s83, 1
          %s192 = scalar_lea.sflag [#allocation6], %s191
          %s193 = sand.u32 %s83, 1
          %s194 = smul.addr %s193, 8
          %s195 = scalar_lea.vmem [#allocation5], %s194
          %s196 = smul.u32 2, %s25
          %s198 = ssub.s32 128, 128
          %199 = vsyncadd %s192, %s198
          %s200 = smul.addr %s24, 2
          %s201 = sadd.s32 %s196, %s200
          %s202 = smul.addr %s201, 64
          %s203 = scalar_lea.hbm %s2, %s202
          %s205 = sshll.u32 %s195, 4
          %s206 = int_to_ptr.vmem [resolvable:$true] %s205
          %208 = dma.hbm_to_vmem [thread:$0]  %s203, 128, %s206, %s192
        $region28: #{tpu_custom_call.1} parent=23 // pred_fallthru
          _
        // Predicated region
        $region29: #{tpu_custom_call.1} parent=23 // pred_check
          %p209 = pneg %p121
        $region30: #{tpu_custom_call.1} parent=23 // pred_check_branch
          %211 = sbr.rel (%p209) target = $region32
        $region31: #{tpu_custom_call.1} parent=23 // pred_region
          %s212 = smul.u32 2, %s25
          %p213 = scmp.lt.s32.totalorder %s24, 1
          %s214 = scalar_select %p213, %s24, 1
          %p215 = scmp.lt.s32.totalorder %s212, 1
          %s216 = scalar_select %p215, %s212, 1
          %s217 = smul.addr %s214, 2
          %s218 = sadd.s32 %s216, %s217
          %s219 = smul.addr %s218, 4
          %s220 = scalar_lea.vmem %s3, %s219
          %s221 = smul.u32 2, %s25
        $region32: #{tpu_custom_call.1} parent=23 // pred_fallthru
          _
      $region24: #{tpu_custom_call.1} parent=5 // pred_fallthru
        _
      %p222 = scmp.le.s32.totalorder 1, %s17
      %p223 = scmp.lt.s32.totalorder %s17, 3
      %p224 = pnand %p222, %p223
      %p225 = pneg %p224
      // Predicated region
      $region33: #{tpu_custom_call.1} parent=5 // pred_check
        _
      $region34: #{tpu_custom_call.1} parent=5 // pred_check_branch
        %227 = sbr.rel (%p224) target = $region36
      $region35: #{tpu_custom_call.1} parent=5 // pred_region
        %s228 = ssub.s32 %s17, 1
        // Predicated region
        $region37: #{tpu_custom_call.1} parent=35 // pred_check
          %p229 = pneg %p50
        $region38: #{tpu_custom_call.1} parent=35 // pred_check_branch
          %231 = sbr.rel (%p229) target = $region40
        $region39: #{tpu_custom_call.1} parent=35 // pred_region
          %232 = dma.done [#allocation3], 64
        $region40: #{tpu_custom_call.1} parent=35 // pred_fallthru
          _
        %s233 = sand.u32 %s86, 1
        %s234 = scalar_lea.sflag [#allocation6], %s233
        %s235 = sand.u32 %s86, 1
        %s236 = smul.addr %s235, 8
        %s237 = scalar_lea.vmem [#allocation5], %s236
        // Predicated region
        $region41: #{tpu_custom_call.1} parent=35 // pred_check
          %p238 = pneg %p99
        $region42: #{tpu_custom_call.1} parent=35 // pred_check_branch
          %240 = sbr.rel (%p238) target = $region44
        $region43: #{tpu_custom_call.1} parent=35 // pred_region
          %241 = dma.done %s234, 128
        $region44: #{tpu_custom_call.1} parent=35 // pred_fallthru
          _
        %p242 = pneg %p50
        %p243 = pneg %p47
        %p244 = pneg %p71
        %p245 = pneg %p68
        %s246 = sand.u32 %s86, 1
        %s247 = scalar_lea.sflag [#allocation6], %s246
        %s248 = sand.u32 %s86, 1
        %s249 = smul.addr %s248, 8
        %s250 = scalar_lea.vmem [#allocation5], %s249
        %p251 = pneg %p99
        %p252 = pneg %p96
        %s253 = smul.u32 2, %s27
        %p254 = scmp.lt.s32.totalorder %s26, 1
        %s255 = scalar_select %p254, %s26, 1
        %p256 = scmp.lt.s32.totalorder %s253, 1
        %s257 = scalar_select %p256, %s253, 1
        %s258 = smul.addr %s255, 2
        %s259 = sadd.s32 %s257, %s258
        %s260 = smul.addr %s259, 4
        %s261 = scalar_lea.vmem %s3, %s260
        %p262 = pneg %p127
        %p263 = pneg %p124
        %p264 = pneg %p155
        %p265 = pneg %p152
        %s266 = sand.u32 %s142, 1
        %s267 = scalar_lea.sflag [#allocation4], %s266
        %s268 = sand.u32 %s142, 1
        %s269 = smul.addr %s268, 8
        %s270 = scalar_lea.vmem [#allocation7], %s269
        %s271 = smul.u32 2, %s27
        %s272 = smul.u32 2, %s27
        %p273 = scmp.lt.s32.totalorder %s26, 1
        %s274 = scalar_select %p273, %s26, 1
        %p275 = scmp.lt.s32.totalorder %s272, 1
        %s276 = scalar_select %p275, %s272, 1
        %s277 = smul.addr %s274, 2
        %s278 = sadd.s32 %s276, %s277
        %s279 = smul.addr %s278, 4
        %s280 = scalar_lea.vmem %s3, %s279
        %s281 = smul.u32 2, %s27
        %s282 = smul.u32 2, %s27
        %v283 = vld [vmem:[#allocation2] sm:$0xf]
        %v284 = vld [vmem:[%s280] sm:$0xff]
        %v285 = vld [vmem:[%s1] sm:$0xf]
        %287 = vset.pattern.permute.xlu0 0
        %288 = vperm.xlu0 %287, %v285
        %v289 = vpop.permute.xlu0 %288
        %v292 = vcombine.high %v284, %v284
        %vm293 = vcmask 31744
        %v295 = vsel %vm293, %v283, 0
        %vm297 = vcmask 1043456
        %v298 = vsel %vm297, %v284, 0
        %v300 = vsel %vm297, %v292, 0
        %302 = vmatprep.subr.mxu0 %v300
        %303 = vmatpush1.msra.mxu0 %v298
        %304 = vmatprep.subr.mxu0 0.0
        %305 = vmatpush1.msra.mxu0 0.0
        %306 = vmatprep.subr.mxu0 0.0
        %307 = vmatpush1.msra.mxu0 0.0
        %308 = vmatprep.subr.mxu0 0.0
        %309 = vmatpush1.msra.mxu0 0.0
        %310 = vmatprep.subr.mxu0 0.0
        %311 = vmatpush1.msra.mxu0 0.0
        %312 = vmatprep.subr.mxu0 0.0
        %313 = vmatpush1.msra.mxu0 0.0
        %314 = vmatprep.subr.mxu0 0.0
        %315 = vmatpush1.msra.mxu0 0.0
        %316 = vmatprep.subr.mxu0 0.0
        %317 = vmatpush1.msra.mxu0 0.0
        %318 = vmatprep.subr.mxu0 0.0
        %319 = vmatpush1.msra.mxu0 0.0
        %320 = vmatprep.subr.mxu0 0.0
        %321 = vmatpush1.msra.mxu0 0.0
        %322 = vmatprep.subr.mxu0 0.0
        %323 = vmatpush1.msra.mxu0 0.0
        %324 = vmatprep.subr.mxu0 0.0
        %325 = vmatpush1.msra.mxu0 0.0
        %326 = vmatprep.subr.mxu0 0.0
        %327 = vmatpush1.msra.mxu0 0.0
        %328 = vmatprep.subr.mxu0 0.0
        %329 = vmatpush1.msra.mxu0 0.0
        %330 = vmatprep.subr.mxu0 0.0
        %331 = vmatpush1.msra.mxu0 0.0
        %332 = vmatprep.subr.mxu0 0.0
        %333 = vmatpush1.msra.mxu0 0.0
        %334 = vmatprep.subr.mxu0 0.0
        %335 = vmatpush1.msra.mxu0 0.0
        %336 = vmatprep.subr.mxu0 0.0
        %337 = vmatpush1.msra.mxu0 0.0
        %338 = vmatprep.subr.mxu0 0.0
        %339 = vmatpush1.msra.mxu0 0.0
        %340 = vmatprep.subr.mxu0 0.0
        %341 = vmatpush1.msra.mxu0 0.0
        %342 = vmatprep.subr.mxu0 0.0
        %343 = vmatpush1.msra.mxu0 0.0
        %344 = vmatprep.subr.mxu0 0.0
        %345 = vmatpush1.msra.mxu0 0.0
        %346 = vmatprep.subr.mxu0 0.0
        %347 = vmatpush1.msra.mxu0 0.0
        %348 = vmatprep.subr.mxu0 0.0
        %349 = vmatpush1.msra.mxu0 0.0
        %350 = vmatprep.subr.mxu0 0.0
        %351 = vmatpush1.msra.mxu0 0.0
        %352 = vmatprep.subr.mxu0 0.0
        %353 = vmatpush1.msra.mxu0 0.0
        %354 = vmatprep.subr.mxu0 0.0
        %355 = vmatpush1.msra.mxu0 0.0
        %356 = vmatprep.subr.mxu0 0.0
        %357 = vmatpush1.msra.mxu0 0.0
        %358 = vmatprep.subr.mxu0 0.0
        %359 = vmatpush1.msra.mxu0 0.0
        %360 = vmatprep.subr.mxu0 0.0
        %361 = vmatpush1.msra.mxu0 0.0
        %362 = vmatprep.subr.mxu0 0.0
        %363 = vmatpush1.msra.mxu0 0.0
        %364 = vmatprep.subr.mxu0 0.0
        %365 = vmatpush1.msra.mxu0 0.0
        %366 = vmatprep.mubr.f32.mxu0 0.0
        %367 = vmatmul.mubr.f32.gmra.mrb[0].mxu0 %v295
        %v368 = vpop.f32.mrb[0].mxu0
        %v369 = vadd.f32 %v289, %v368
        %v370 = vpop.f32.mrb[0].mxu0
        %v371 = vadd.f32 %v289, %v370
        %372 = vdwg.mxu0
        %v373 = vxor.u32 %v369, 2147483648
        %v374 = vxor.u32 %v371, 2147483648
        %v375 = vmul.f32 %v373, 1.442695
        %v376 = vpow.pop %v375
        %v377 = vmul.f32 %v374, 1.442695
        %v378 = vpow.pop %v377
        %v379 = vadd.f32 %v376, 1.0
        %v380 = vadd.f32 %v378, 1.0
        %v381 = vrcp.pop %v379
        %v382 = vmul.f32 1.0, %v381
        %v383 = vrcp.pop %v380
        %v384 = vmul.f32 1.0, %v383
        %v385 = vld [vmem:[%s237] sm:$0xff]
        %v388 = vcombine.low %v382, %v384
        %v390 = vmul.f32 %v385, %v388
        %v391 = vsub.f32 1.0, %v382
        %v392 = vsub.f32 1.0, %v384
        %v395 = vcombine.low %v391, %v392
        %v397 = vmul.f32 %v385, %v395
        %v398 = vadd.f32 %v390, %v397
        %399 = vst [vmem:[%s270] sm:$0xff] %v398
        %s400 = sand.u32 %s142, 1
        %s401 = scalar_lea.sflag [#allocation4], %s400
        %s402 = sand.u32 %s142, 1
        %s403 = smul.addr %s402, 8
        %s404 = scalar_lea.vmem [#allocation7], %s403
        // Predicated region
        $region45: #{tpu_custom_call.1} parent=35 // pred_check
          %p405 = pneg %p152
        $region46: #{tpu_custom_call.1} parent=35 // pred_check_branch
          %407 = sbr.rel (%p405) target = $region48
        $region47: #{tpu_custom_call.1} parent=35 // pred_region
          %s408 = smul.u32 2, %s27
          %s410 = ssub.s32 128, 128
          %411 = vsyncadd %s401, %s410
          %s412 = smul.addr %s26, 2
          %s413 = sadd.s32 %s408, %s412
          %s414 = smul.addr %s413, 64
          %s415 = scalar_lea.hbm %s4, %s414
          %s417 = sshll.u32 %s404, 4
          %s418 = int_to_ptr.vmem [resolvable:$true] %s417
          %420 = dma.vmem_to_hbm [thread:$0]  %s418, 128, %s415, %s401
        $region48: #{tpu_custom_call.1} parent=35 // pred_fallthru
          _
      $region36: #{tpu_custom_call.1} parent=5 // pred_fallthru
        _
      %p421 = scmp.le.s32.totalorder 2, %s17
      // Predicated region
      $region49: #{tpu_custom_call.1} parent=5 // pred_check
        %p422 = pneg %p421
      $region50: #{tpu_custom_call.1} parent=5 // pred_check_branch
        %424 = sbr.rel (%p422) target = $region52
      $region51: #{tpu_custom_call.1} parent=5 // pred_region
        %s425 = ssub.s32 %s17, 2
        // Predicated region
        $region53: #{tpu_custom_call.1} parent=51 // pred_check
          %p426 = pneg %p158
        $region54: #{tpu_custom_call.1} parent=51 // pred_check_branch
          %428 = sbr.rel (%p426) target = $region56
        $region55: #{tpu_custom_call.1} parent=51 // pred_region
          %s429 = sand.u32 %s143, 1
          %s430 = scalar_lea.sflag [#allocation4], %s429
          %s431 = sand.u32 %s143, 1
          %s432 = smul.addr %s431, 8
          %s433 = scalar_lea.vmem [#allocation7], %s432
          %434 = dma.done %s430, 128
        $region56: #{tpu_custom_call.1} parent=51 // pred_fallthru
          _
      $region52: #{tpu_custom_call.1} parent=5 // pred_fallthru
        _
    $region6: #{tpu_custom_call.1} parent=1 // loop_footer
      %s21 = sadd.s32 1, %s17
    $region7: #{tpu_custom_call.1} parent=1 // loop_footer_branch
      %16 = sbr.rel target = $region3
    $region8: #{tpu_custom_call.1} parent=1 // loop_exit
      _
    %435 = vsyncpa [#allocation3], 1
    %s436 = scalar_lea.sflag [#allocation3], 1
    %437 = vsyncpa %s436, 1
    %438 = vsyncpa [#allocation6], 1
    %s439 = scalar_lea.sflag [#allocation6], 1
    %440 = vsyncpa %s439, 1
    %441 = vsyncpa [#allocation4], 1
    %s442 = scalar_lea.sflag [#allocation4], 1
    %443 = vsyncpa %s442, 1

</llo_original>
